<compile_context>
chip_gen: v7x
topology: tpu7x:2x2x1
jax: 0.10.0
libtpu: 0.0.40
codegen_flags: <defaults>
</compile_context>

<pallas_src>
import jax
import jax.numpy as jnp
from jax import lax
from jax.experimental import pallas as pl
from jax.experimental.pallas import tpu as pltpu

LANES = 128
TILE_R_MAX = 4096                      # 4096*128*4B = 2 MiB per f32 operand tile
VMEM_LIMIT = 32 * 1024 * 1024          # safe on v5e/v6e (128 MiB) and v7x (64 MiB)


# ----------------------------------------------------------------------------
# Kernels
# ----------------------------------------------------------------------------
def _make_sum_kernel(tile_r, n_valid, inner_tiles, need_mask, scale,
                     has_weight, acc_rows):
    """Kernel: per-core partial sums of scale * weight * |pred - nan0(target)|."""

    def kernel(*refs):
        if has_weight:
            pred_ref, target_ref, weight_ref, out_ref, acc_ref = refs
        else:
            pred_ref, target_ref, out_ref, acc_ref = refs
            weight_ref = None

        c = pl.program_id(0)   # outer "parallel" (per-TensorCore) axis
        i = pl.program_id(1)   # inner "arbitrary" reduction axis

        @pl.when(i == 0)
        def _():
            acc_ref[...] = jnp.zeros_like(acc_ref)

        t = target_ref[...].astype(jnp.float32)
        t = jnp.where(jnp.isnan(t), 0.0, t)          # target[isnan(target)] = 0
        diff = jnp.abs(pred_ref[...].astype(jnp.float32) - t)
        if has_weight:
            diff = diff * weight_ref[...].astype(jnp.float32)

        if need_mask:
            # Mask tail elements / over-covered (clamped) blocks by their
            # *logical* flat index, so garbage rows and odd-split blocks
            # contribute exactly zero.
            blk = c * inner_tiles + i
            row = blk * tile_r + lax.broadcasted_iota(
                jnp.int32, (tile_r, LANES), 0)
            lane = lax.broadcasted_iota(jnp.int32, (tile_r, LANES), 1)
            elem = row * LANES + lane
            diff = jnp.where(elem < n_valid, diff, 0.0)

        if acc_rows == 8:
            # Collapse rows with plain VPU adds (sublane-group-aligned reshape);
            # the cross-lane/sublane reduce happens once, outside the kernel.
            acc_ref[...] += diff.reshape(-1, 8, LANES).sum(axis=0)
        else:
            acc_ref[...] += jnp.sum(diff, axis=0, keepdims=True)

        @pl.when(i == inner_tiles - 1)
        def _():
            if scale != 1.0:
                out_ref[...] = acc_ref[...] * scale
            else:
                out_ref[...] = acc_ref[...]

    return kernel


def _make_elem_kernel(has_weight, scale):
    """Kernel: elementwise scale * weight * |pred - nan0(target)| (reduction='none')."""

    def kernel(*refs):
        if has_weight:
            pred_ref, target_ref, weight_ref, out_ref = refs
        else:
            pred_ref, target_ref, out_ref = refs
            weight_ref = None

        t = target_ref[...].astype(jnp.float32)
        t = jnp.where(jnp.isnan(t), 0.0, t)
        loss = jnp.abs(pred_ref[...].astype(jnp.float32) - t)
        if has_weight:
            loss = loss * weight_ref[...].astype(jnp.float32)
        if scale != 1.0:
            loss = loss * scale
        out_ref[...] = loss.astype(out_ref.dtype)

    return kernel


# ----------------------------------------------------------------------------
# Host-side glue
# ----------------------------------------------------------------------------
def _to_slab(x):
    """Flatten to (R, 128) in the native dtype; pad only if numel % 128 != 0."""
    n = x.size
    flat = jnp.ravel(x)
    rem = n % LANES
    if rem:
        flat = jnp.pad(flat, (0, LANES - rem))
    r = flat.size // LANES
    return flat.reshape(r, LANES), n, r


def _l1_sum(pred, target, weight=None, scale=1.0):
    """Fused sum(scale * weight * |pred - nan0(target)|) -> f32 scalar."""
    p2d, n, r = _to_slab(pred)
    t2d, _, _ = _to_slab(target)
    inputs = [p2d, t2d]
    has_weight = weight is not None
    if has_weight:
        inputs.append(_to_slab(weight)[0])

    tile_r = min(TILE_R_MAX, r)
    num_tiles = pl.cdiv(r, tile_r)
    outer = 2 if num_tiles >= 2 else 1            # split rows across TensorCores
    inner = pl.cdiv(num_tiles, outer)
    covered = outer * inner * tile_r * LANES
    need_mask = covered != n
    # outer == 2 implies r > TILE_R_MAX, hence tile_r == TILE_R_MAX (mult. of 8),
    # so acc_rows == 1 only ever occurs with a single-core, single-tile grid.
    acc_rows = 8 if tile_r % 8 == 0 else 1
    last_tile = num_tiles - 1

    def in_map(c, i):
        blk = c * inner + i
        if need_mask:
            blk = jnp.minimum(blk, last_tile)     # clamp odd-split OOB blocks
        return (blk, 0)

    in_spec = pl.BlockSpec((tile_r, LANES), in_map)
    kernel = _make_sum_kernel(tile_r, n, inner, need_mask, float(scale),
                              has_weight, acc_rows)

    out = pl.pallas_call(
        kernel,
        out_shape=jax.ShapeDtypeStruct((outer * acc_rows, LANES), jnp.float32),
        grid_spec=pltpu.PrefetchScalarGridSpec(
            num_scalar_prefetch=0,
            grid=(outer, inner),
            in_specs=[in_spec] * len(inputs),
            out_specs=pl.BlockSpec((acc_rows, LANES), lambda c, i: (c, 0)),
            scratch_shapes=[pltpu.VMEM((acc_rows, LANES), jnp.float32)],
        ),
        compiler_params=pltpu.CompilerParams(
            dimension_semantics=("parallel", "arbitrary"),
            vmem_limit_bytes=VMEM_LIMIT),
    )(*inputs)
    # Tiny final collapse of the lane-dense per-core partials.
    return jnp.sum(out)


def _l1_elementwise(pred, target, weight=None, scale=1.0):
    """Elementwise loss (reduction='none'), returned in pred's dtype."""
    p2d, n, r = _to_slab(pred)
    t2d, _, _ = _to_slab(target)
    inputs = [p2d, t2d]
    has_weight = weight is not None
    if has_weight:
        inputs.append(_to_slab(weight)[0])

    tile_r = min(TILE_R_MAX, r)
    num_tiles = pl.cdiv(r, tile_r)
    spec = pl.BlockSpec((tile_r, LANES), lambda i: (i, 0))
    kernel = _make_elem_kernel(has_weight, float(scale))

    out2d = pl.pallas_call(
        kernel,
        out_shape=jax.ShapeDtypeStruct((r, LANES), pred.dtype),
        grid_spec=pltpu.PrefetchScalarGridSpec(
            num_scalar_prefetch=0,
            grid=(num_tiles,),
            in_specs=[spec] * len(inputs),
            out_specs=spec,
        ),
        compiler_params=pltpu.CompilerParams(
            dimension_semantics=("parallel",),
            vmem_limit_bytes=VMEM_LIMIT),
    )(*inputs)

    flat = out2d.reshape(-1)
    if flat.size != n:
        flat = flat[:n]
    return flat.reshape(pred.shape)


# ----------------------------------------------------------------------------
# Module-equivalent wrapper
# ----------------------------------------------------------------------------
class L1LossAnalyse:
    """JAX/Pallas equivalent of L1Loss_analyse (mmdet weighted L1 with NaN fix)."""

    def __init__(self, reduction='mean', loss_weight=1.0):
        self.reduction = reduction
        self.loss_weight = float(loss_weight)
        self.iter = 0  # NOTE: Python side effect; not tracked under jit.

    def __call__(self, pred, target, weight=None, avg_factor=None,
                 reduction_override=None):
        assert reduction_override in (None, 'none', 'mean', 'sum')
        reduction = reduction_override if reduction_override else self.reduction
        self.iter += 1

        assert pred.shape == target.shape
        # TODO(synk): the torch module prints NaN diagnostics ('l1 nan pred',
        # 'nan trg', 'nan loss'); host-side prints have no Pallas equivalent.

        if target.size == 0:
            # pred.sum() * 0 semantics
            return jnp.zeros((), dtype=pred.dtype) * self.loss_weight

        if weight is not None and weight.shape != pred.shape:
            weight = jnp.broadcast_to(weight, pred.shape)

        if reduction == 'none':
            # mmdet's weight_reduce_loss silently ignores avg_factor for 'none'.
            return _l1_elementwise(pred, target, weight, scale=self.loss_weight)

        if reduction == 'sum':
            if avg_factor is not None:
                raise ValueError('avg_factor can not be used with reduction="sum"')
            return _l1_sum(pred, target, weight, scale=self.loss_weight)

        if reduction == 'mean':
            if avg_factor is None:
                return _l1_sum(pred, target, weight,
                               scale=self.loss_weight / float(pred.size))
            if isinstance(avg_factor, (int, float)):
                return _l1_sum(pred, target, weight,
                               scale=self.loss_weight / float(avg_factor))
            # traced avg_factor: fold loss_weight in-kernel, divide outside.
            return _l1_sum(pred, target, weight,
                           scale=self.loss_weight) / avg_factor

        raise ValueError(f'unknown reduction {reduction}')


# ----------------------------------------------------------------------------
# Test
# ----------------------------------------------------------------------------
if __name__ == "__main__":
    key = jax.random.PRNGKey(0)
    k1, k2, k3 = jax.random.split(key, 3)
    # NCHW-like input, as a typical detection regression map
    pred = jax.random.normal(k1, (2, 4, 16, 16), dtype=jnp.float32)
    target = jax.random.normal(k2, (2, 4, 16, 16), dtype=jnp.float32)
    # inject NaNs into the target to exercise the NaN-handling path
    target = target.at[0, 1, 3, 5].set(jnp.nan)
    target = target.at[1, 2, 7, 9].set(jnp.nan)
    weight = jax.random.uniform(k3, pred.shape, dtype=jnp.float32)

    t_fixed = jnp.where(jnp.isnan(target), 0.0, target)
    ref_elem = jnp.abs(pred - t_fixed)

    loss_mod = L1LossAnalyse(reduction='mean', loss_weight=1.0)

    out_mean = loss_mod(pred, target)
    jax.block_until_ready(out_mean)
    assert jnp.allclose(out_mean, jnp.mean(ref_elem), rtol=1e-5, atol=1e-5), out_mean

    out_sum = loss_mod(pred, target, reduction_override='sum')
    jax.block_until_ready(out_sum)
    assert jnp.allclose(out_sum, jnp.sum(ref_elem), rtol=1e-5, atol=1e-4), out_sum

    out_none = loss_mod(pred, target, reduction_override='none')
    jax.block_until_ready(out_none)
    assert out_none.shape == pred.shape and out_none.dtype == pred.dtype
    assert jnp.allclose(out_none, ref_elem, rtol=1e-5, atol=1e-5)

    # fused per-element weight, mean / avg_factor paths
    out_wmean = loss_mod(pred, target, weight=weight)
    jax.block_until_ready(out_wmean)
    assert jnp.allclose(out_wmean, jnp.mean(ref_elem * weight),
                        rtol=1e-5, atol=1e-5), out_wmean

    out_waf = loss_mod(pred, target, weight=weight, avg_factor=100.0)
    jax.block_until_ready(out_waf)
    assert jnp.allclose(out_waf, jnp.sum(ref_elem * weight) / 100.0,
                        rtol=1e-5, atol=1e-5), out_waf

    # loss_weight folding
    loss_mod2 = L1LossAnalyse(reduction='sum', loss_weight=2.0)
    out_lw = loss_mod2(pred, target)
    jax.block_until_ready(out_lw)
    assert jnp.allclose(out_lw, 2.0 * jnp.sum(ref_elem), rtol=1e-5, atol=1e-4)

    # non-lane-aligned shape exercises the in-kernel tail mask / output slice
    pred2 = jax.random.normal(k1, (3, 5, 7), dtype=jnp.float32)
    target2 = jax.random.normal(k2, (3, 5, 7), dtype=jnp.float32)
    out2 = loss_mod(pred2, target2, reduction_override='sum')
    jax.block_until_ready(out2)
    assert jnp.allclose(out2, jnp.sum(jnp.abs(pred2 - target2)),
                        rtol=1e-5, atol=1e-4), out2
    out2n = loss_mod(pred2, target2, reduction_override='none')
    jax.block_until_ready(out2n)
    assert out2n.shape == pred2.shape
    assert jnp.allclose(out2n, jnp.abs(pred2 - target2), rtol=1e-5, atol=1e-5)

    print("KERNEL_OK")
</pallas_src>

<mosaic_0001>
module attributes {stable_mosaic.version = 11 : i64} {
  func.func @kernel(%arg0: i32, %arg1: i32, %arg2: memref<16x128xf32, #tpu.memory_space<vmem>>, %arg3: memref<16x128xf32, #tpu.memory_space<vmem>>, %arg4: memref<8x128xf32, #tpu.memory_space<vmem>>, %arg5: memref<8x128xf32, #tpu.memory_space<vmem>>) attributes {dimension_semantics = [#tpu.dimension_semantics<parallel>, #tpu.dimension_semantics<arbitrary>], iteration_bounds = array<i64: 1, 1>, scalar_prefetch = 0 : i64, scratch_operands = 1 : i64, tpu.core_type = #tpu.core_type<tc>, window_params = [{transform_indices = @transform_0, window_bounds = array<i64: 16, 128>}, {transform_indices = @transform_1, window_bounds = array<i64: 16, 128>}, {transform_indices = @transform_2, window_bounds = array<i64: 8, 128>}]} {
    %c0_i32 = arith.constant 0 : i32
    %0 = arith.cmpi eq, %arg1, %c0_i32 : i32
    %1 = arith.extui %0 : i1 to i32
    %c0_i32_0 = arith.constant 0 : i32
    %2 = arith.cmpi ne, %1, %c0_i32_0 : i32
    scf.if %2 {
      %cst_11 = arith.constant 0.000000e+00 : f32
      %18 = vector.broadcast %cst_11 : f32 to vector<8x128xf32>
      %c0_12 = arith.constant 0 : index
      %c0_13 = arith.constant 0 : index
      %19 = vector.load %arg5[%c0_12, %c0_13] : memref<8x128xf32, #tpu.memory_space<vmem>>, vector<8x128xf32>
      tpu.vector_store %arg5[%c0_12, %c0_13], %18 {strides = array<i32>} : memref<8x128xf32, #tpu.memory_space<vmem>>, vector<8x128xf32>,
    } else {
    }
    %c0 = arith.constant 0 : index
    %c0_1 = arith.constant 0 : index
    %3 = vector.load %arg3[%c0, %c0_1] : memref<16x128xf32, #tpu.memory_space<vmem>>, vector<16x128xf32>
    %4 = arith.cmpf one, %3, %3 : vector<16x128xf32>
    %cst = arith.constant 0.000000e+00 : f32
    %5 = vector.broadcast %cst : f32 to vector<16x128xf32>
    %6 = arith.select %4, %5, %3 : vector<16x128xi1>, vector<16x128xf32>
    %c0_2 = arith.constant 0 : index
    %c0_3 = arith.constant 0 : index
    %7 = vector.load %arg2[%c0_2, %c0_3] : memref<16x128xf32, #tpu.memory_space<vmem>>, vector<16x128xf32>
    %8 = arith.subf %7, %6 : vector<16x128xf32>
    %9 = math.absf %8 : vector<16x128xf32>
    %c0_4 = arith.constant 0 : index
    %c0_5 = arith.constant 0 : index
    %10 = vector.load %arg5[%c0_4, %c0_5] : memref<8x128xf32, #tpu.memory_space<vmem>>, vector<8x128xf32>
    %11 = vector.shape_cast %9 : vector<16x128xf32> to vector<2x8x128xf32>
    %cst_6 = arith.constant dense<0.000000e+00> : vector<8x128xf32>
    %12 = vector.multi_reduction <add>, %11, %cst_6 [0] : vector<2x8x128xf32> to vector<8x128xf32>
    %13 = arith.addf %10, %12 : vector<8x128xf32>
    %c0_7 = arith.constant 0 : index
    %c0_8 = arith.constant 0 : index
    %14 = vector.load %arg5[%c0_7, %c0_8] : memref<8x128xf32, #tpu.memory_space<vmem>>, vector<8x128xf32>
    tpu.vector_store %arg5[%c0_7, %c0_8], %13 {strides = array<i32>} : memref<8x128xf32, #tpu.memory_space<vmem>>, vector<8x128xf32>,
    %c0_i32_9 = arith.constant 0 : i32
    %15 = arith.cmpi eq, %arg1, %c0_i32_9 : i32
    %16 = arith.extui %15 : i1 to i32
    %c0_i32_10 = arith.constant 0 : i32
    %17 = arith.cmpi ne, %16, %c0_i32_10 : i32
    scf.if %17 {
      %c0_11 = arith.constant 0 : index
      %c0_12 = arith.constant 0 : index
      %18 = vector.load %arg5[%c0_11, %c0_12] : memref<8x128xf32, #tpu.memory_space<vmem>>, vector<8x128xf32>
      %cst_13 = arith.constant 4.8828125E-4 : f32
      %19 = vector.broadcast %cst_13 : f32 to vector<8x128xf32>
      %20 = arith.mulf %18, %19 : vector<8x128xf32>
      %c0_14 = arith.constant 0 : index
      %c0_15 = arith.constant 0 : index
      %21 = vector.load %arg4[%c0_14, %c0_15] : memref<8x128xf32, #tpu.memory_space<vmem>>, vector<8x128xf32>
      tpu.vector_store %arg4[%c0_14, %c0_15], %20 {strides = array<i32>} : memref<8x128xf32, #tpu.memory_space<vmem>>, vector<8x128xf32>,
    } else {
    }
    return
  }
  func.func @transform_0(%arg0: i32, %arg1: i32) -> (i32, i32) {
    %c1_i32 = arith.constant 1 : i32
    %0 = arith.muli %arg0, %c1_i32 : i32
    %1 = arith.addi %0, %arg1 : i32
    %c0_i32 = arith.constant 0 : i32
    %c0_i32_0 = arith.constant 0 : i32
    return %1, %c0_i32 : i32, i32
  }
  func.func @transform_1(%arg0: i32, %arg1: i32) -> (i32, i32) {
    %c1_i32 = arith.constant 1 : i32
    %0 = arith.muli %arg0, %c1_i32 : i32
    %1 = arith.addi %0, %arg1 : i32
    %c0_i32 = arith.constant 0 : i32
    %c0_i32_0 = arith.constant 0 : i32
    return %1, %c0_i32 : i32, i32
  }
  func.func @transform_2(%arg0: i32, %arg1: i32) -> (i32, i32) {
    %c0_i32 = arith.constant 0 : i32
    %c0_i32_0 = arith.constant 0 : i32
    return %arg0, %c0_i32 : i32, i32
  }
}

</mosaic_0001>

<llo_original>
// kernel: tpu_custom_call.1
$region0: #{tpu_custom_call.1}
  #allocation0 [shape = 'u32[]', space=smem, size = 0x4, offset = 0x4, fixed_abs, tag = 'smem constant byte address 0x4 - core index']
  #allocation1 [shape = 'u32[144,128]{1,0:T(1,128)}', space=vmem, size = 0x12000, scoped, tag = 'internal scratch']
  #allocation2 [shape = 'f32[8,128]{1,0:T(8,128)}', space=vmem, size = 0x1000, scoped, tag = 'scratch operand']
  %s0 = inlined_call_operand.hbm [shape: f32[16,128], index: 0, kind: input, shape index: {}]
  %s1 = inlined_call_operand.hbm [shape: f32[16,128], index: 1, kind: input, shape index: {}]
  %s2 = inlined_call_operand.hbm [shape: f32[8,128], index: 2, kind: output, shape index: {}]
  %s3 = sld [smem:[#allocation0]]
  $region34: #{tpu_custom_call.1} parent=0
    _
  %s5 = ssub.s32 1, %s3
  %s6 = scalar_select 0, %s5, %s3
  $region1: #{tpu_custom_call.1} parent=0
    #allocation3 [shape = 'u8[8192]{0}', space=vmem, size = 0x2000, scoped, tag = 'input window, operand 0, single buffered']
    #allocation4 [shape = 's32[1]{0}', space=sflag, size = 0x4, scoped, tag = 'scoped memory for tpu_custom_call.1']
    #allocation5 [shape = 's32[1]{0}', space=sflag, size = 0x4, scoped, tag = 'scoped memory for tpu_custom_call.1']
    #allocation6 [shape = 'u8[8192]{0}', space=vmem, size = 0x2000, scoped, tag = 'input window, operand 1, single buffered']
    #allocation7 [shape = 's32[1]{0}', space=sflag, size = 0x4, scoped, tag = 'scoped memory for tpu_custom_call.1']
    #allocation8 [shape = 'u8[4096]{0}', space=vmem, size = 0x1000, scoped, tag = 'output window, operand 0, single buffered']
    %7 = vsyncpa [#allocation4], 0
    %8 = vsyncpa [#allocation7], 0
    %9 = vsyncpa [#allocation5], 0
    // Predicated region
    $region2: #{tpu_custom_call.1} parent=1 // pred_check
      _
    $region3: #{tpu_custom_call.1} parent=1 // pred_check_branch
      %11 = sbr.rel (0) target = $region5
    $region4: #{tpu_custom_call.1} parent=1 // pred_region
      %s12 = sadd.s32 0, 0
      %s13 = smul.u32 2, %s12
      %s15 = ssub.s32 256, 256
      %16 = vsyncadd [#allocation4], %s15
      %s17 = smul.addr %s13, 128
      %s18 = scalar_lea.hbm %s0, %s17
      %s19 = sshll.u32 [#allocation3], 4
      %s20 = int_to_ptr.vmem [resolvable:$true] %s19
      %25 = dma.hbm_to_vmem [thread:$0]  %s18, 256, %s20, [#allocation4], 128, 128, 8
    $region5: #{tpu_custom_call.1} parent=1 // pred_fallthru
      _
    // Predicated region
    $region6: #{tpu_custom_call.1} parent=1 // pred_check
      _
    $region7: #{tpu_custom_call.1} parent=1 // pred_check_branch
      %27 = sbr.rel (0) target = $region9
    $region8: #{tpu_custom_call.1} parent=1 // pred_region
      %s28 = sadd.s32 0, 0
      %s29 = smul.u32 2, %s28
      %s31 = ssub.s32 256, 256
      %32 = vsyncadd [#allocation7], %s31
      %s33 = smul.addr %s29, 128
      %s34 = scalar_lea.hbm %s1, %s33
      %s35 = sshll.u32 [#allocation6], 4
      %s36 = int_to_ptr.vmem [resolvable:$true] %s35
      %41 = dma.hbm_to_vmem [thread:$0]  %s34, 256, %s36, [#allocation7], 128, 128, 8
    $region9: #{tpu_custom_call.1} parent=1 // pred_fallthru
      _
    // Predicated region
    $region10: #{tpu_custom_call.1} parent=1 // pred_check
      _
    $region11: #{tpu_custom_call.1} parent=1 // pred_check_branch
      %43 = sbr.rel (0) target = $region13
    $region12: #{tpu_custom_call.1} parent=1 // pred_region
      %44 = dma.done [#allocation4], 256
    $region13: #{tpu_custom_call.1} parent=1 // pred_fallthru
      _
    // Predicated region
    $region14: #{tpu_custom_call.1} parent=1 // pred_check
      _
    $region15: #{tpu_custom_call.1} parent=1 // pred_check_branch
      %46 = sbr.rel (0) target = $region17
    $region16: #{tpu_custom_call.1} parent=1 // pred_region
      %47 = dma.done [#allocation7], 256
    $region17: #{tpu_custom_call.1} parent=1 // pred_fallthru
      _
    %s48 = sadd.s32 0, 0
    %s49 = smul.u32 2, %s48
    %s50 = sadd.s32 0, 0
    %s51 = smul.u32 2, %s50
    %p52 = scmp.eq.s32.totalorder 0, 0
    // Predicated region
    $region18: #{tpu_custom_call.1} parent=1 // pred_check
      %p53 = pneg %p52
    $region19: #{tpu_custom_call.1} parent=1 // pred_check_branch
      %55 = sbr.rel (%p53) target = $region21
    $region20: #{tpu_custom_call.1} parent=1 // pred_region
      %56 = vst [vmem:[#allocation2] sm:$0xff] 0.0
    $region21: #{tpu_custom_call.1} parent=1 // pred_fallthru
      _
    %v57 = vld [vmem:[#allocation6] sm:$0xff]
    %v58 = vld [vmem:[#allocation6 + $0x8] sm:$0xff]
    %vm59 = vcmp.ne.f32.partialorder %v57, %v57
    %vm60 = vcmp.ne.f32.partialorder %v58, %v58
    %v61 = vsel %vm59, 0.0, %v57
    %v62 = vsel %vm60, 0.0, %v58
    %v63 = vld [vmem:[#allocation3] sm:$0xff]
    %v64 = vld [vmem:[#allocation3 + $0x8] sm:$0xff]
    %v65 = vsub.f32 %v63, %v61
    %v66 = vsub.f32 %v64, %v62
    %v67 = vand.u32 2147483647, %v65
    %v68 = vand.u32 2147483647, %v66
    %v69 = vld [vmem:[#allocation2] sm:$0xff]
    %v70 = vadd.f32 %v67, %v68
    %v71 = vadd.f32 %v69, %v70
    %72 = vst [vmem:[#allocation2] sm:$0xff] %v71
    // Predicated region
    $region22: #{tpu_custom_call.1} parent=1 // pred_check
      %p73 = pneg %p52
    $region23: #{tpu_custom_call.1} parent=1 // pred_check_branch
      %75 = sbr.rel (%p73) target = $region25
    $region24: #{tpu_custom_call.1} parent=1 // pred_region
      %v76 = vld [vmem:[#allocation2] sm:$0xff]
      %v77 = vmul.f32 %v76, 0.00048828125
      %78 = vst [vmem:[#allocation8] sm:$0xff] %v77
    $region25: #{tpu_custom_call.1} parent=1 // pred_fallthru
      _
    // Predicated region
    $region26: #{tpu_custom_call.1} parent=1 // pred_check
      _
    $region27: #{tpu_custom_call.1} parent=1 // pred_check_branch
      %80 = sbr.rel (0) target = $region29
    $region28: #{tpu_custom_call.1} parent=1 // pred_region
      %s82 = ssub.s32 128, 128
      %83 = vsyncadd [#allocation5], %s82
      %s85 = sshll.u32 [#allocation8], 4
      %s86 = int_to_ptr.vmem [resolvable:$true] %s85
      %88 = dma.vmem_to_hbm [thread:$0]  %s86, 128, %s2, [#allocation5]
    $region29: #{tpu_custom_call.1} parent=1 // pred_fallthru
      _
    // Predicated region
    $region30: #{tpu_custom_call.1} parent=1 // pred_check
      _
    $region31: #{tpu_custom_call.1} parent=1 // pred_check_branch
      %90 = sbr.rel (0) target = $region33
    $region32: #{tpu_custom_call.1} parent=1 // pred_region
      %91 = dma.done [#allocation5], 128
    $region33: #{tpu_custom_call.1} parent=1 // pred_fallthru
      _
    %92 = vsyncpa [#allocation4], 1
    %93 = vsyncpa [#allocation7], 1
    %94 = vsyncpa [#allocation5], 1

</llo_original>
